<compile_context>
chip_gen: v5e
topology: v5e:2x2
jax: 0.10.0
libtpu: 0.0.40
codegen_flags: <defaults>
</compile_context>

<pallas_src>
import jax
import jax.numpy as jnp
from jax.experimental import pallas as pl
from jax.experimental.pallas import tpu as pltpu


# ---------------------------------------------------------------------------
# Kernels
# ---------------------------------------------------------------------------
def _patch_embed_kernel_single_k(x_ref, w_ref, b_ref, o_ref):
    # x_ref : (tm, K)       flattened patch rows (full K in one block)
    # w_ref : (n_pad, K)    conv weight flattened, K on axis 1 (no transpose)
    # b_ref : (1, n_pad)    bias, zero-padded to lane-dense width
    # o_ref : (tm, n_pad)
    acc = jax.lax.dot_general(
        x_ref[...], w_ref[...],
        dimension_numbers=(((1,), (1,)), ((), ())),
        preferred_element_type=jnp.float32,
    )
    o_ref[...] = (acc + b_ref[...]).astype(o_ref.dtype)


def _patch_embed_kernel_acc(x_ref, w_ref, b_ref, o_ref, acc_ref):
    # x_ref  : (tm, tk)      flattened patch rows
    # w_ref  : (n_pad, tk)   conv weight flattened, K on axis 1 (no transpose)
    # b_ref  : (1, n_pad)    bias, zero-padded to lane-dense width
    # o_ref  : (tm, n_pad)
    # acc_ref: (tm, n_pad)   f32 accumulator, resident across the K grid axis
    @pl.when(pl.program_id(1) == 0)
    def _():
        acc_ref[...] = jnp.zeros_like(acc_ref)

    acc_ref[...] += jax.lax.dot_general(
        x_ref[...], w_ref[...],
        dimension_numbers=(((1,), (1,)), ((), ())),
        preferred_element_type=jnp.float32,
    )

    @pl.when(pl.program_id(1) == pl.num_programs(1) - 1)
    def _():
        o_ref[...] = (acc_ref[...] + b_ref[...]).astype(o_ref.dtype)


# ---------------------------------------------------------------------------
# Wrapper
# ---------------------------------------------------------------------------
def cnn_patches_forward(x, weight, bias, *, tm=512, tk=1024, compute_dtype=None):
    """Forward pass of CnnPatches.

    x      : (b, c_in, H, W)            float32 (or bf16)
    weight : (dim_out, c_in, P, P)      Conv2d weight, stride == kernel == P
    bias   : (dim_out,)
    returns: (b, (H//P)*(W//P), dim_out)
    """
    b, c_in, H, W = x.shape
    dim_out, _, P, _ = weight.shape
    hp, wp = H // P, W // P
    num_patches = hp * wp
    K = c_in * P * P
    m = b * num_patches
    out_dtype = x.dtype

    # --- im2col: pure layout, ordered (b, hp, wp) rows x (c_in, P, P) cols ---
    patches = x.reshape(b, c_in, hp, P, wp, P)
    patches = patches.transpose(0, 2, 4, 1, 3, 5)        # (b, hp, wp, c_in, P, P)
    x2d = patches.reshape(m, K)                           # (M, K)

    # Conv weight flattened to (dim_out, K): a reshape of contiguous memory
    # (free), NOT a transpose -- the kernel contracts on its K axis directly.
    w2d = weight.reshape(dim_out, K)

    # Optional low-precision MXU operands (v6e/v7x); accumulation stays f32.
    if compute_dtype is not None:
        x2d = x2d.astype(compute_dtype)
        w2d = w2d.astype(compute_dtype)

    # --- lane-dense output: pad dim_out up to a multiple of 128 --------------
    n_pad = pl.cdiv(dim_out, 128) * 128
    if n_pad != dim_out:
        w2d = jnp.pad(w2d, ((0, n_pad - dim_out), (0, 0)))
        bias_p = jnp.pad(bias, (0, n_pad - dim_out))
    else:
        bias_p = bias
    b2d = bias_p.reshape(1, n_pad).astype(jnp.float32)

    # --- M tiling (parallel axis) --------------------------------------------
    m8 = ((m + 7) // 8) * 8
    tm_eff = min(tm, m8)                                  # multiple of 8 (or full M)
    m_pad = pl.cdiv(m, tm_eff) * tm_eff
    if m_pad != m:
        x2d = jnp.pad(x2d, ((0, m_pad - m), (0, 0)))

    single_k = K <= tk

    if single_k:
        # -------- FAST PATH: full K in one block, no accumulator -------------
        grid = (m_pad // tm_eff,)
        out2d = pl.pallas_call(
            _patch_embed_kernel_single_k,
            out_shape=jax.ShapeDtypeStruct((m_pad, n_pad), out_dtype),
            grid=grid,
            in_specs=[
                pl.BlockSpec((tm_eff, K), lambda i: (i, 0)),       # x tile
                pl.BlockSpec((n_pad, K), lambda i: (0, 0)),        # weight (resident)
                pl.BlockSpec((1, n_pad), lambda i: (0, 0)),        # bias (resident)
            ],
            out_specs=pl.BlockSpec((tm_eff, n_pad), lambda i: (i, 0)),
            compiler_params=pltpu.CompilerParams(
                dimension_semantics=("parallel",),
            ),
        )(x2d, w2d, b2d)
    else:
        # -------- GENERAL PATH: K-tiled reduction with f32 accumulator -------
        tk_eff = tk                                       # multiple of 128
        k_pad = pl.cdiv(K, tk_eff) * tk_eff
        if k_pad != K:                                    # zero-pad so extra K adds 0
            x2d = jnp.pad(x2d, ((0, 0), (0, k_pad - K)))
            w2d = jnp.pad(w2d, ((0, 0), (0, k_pad - K)))

        grid = (m_pad // tm_eff, k_pad // tk_eff)
        out2d = pl.pallas_call(
            _patch_embed_kernel_acc,
            out_shape=jax.ShapeDtypeStruct((m_pad, n_pad), out_dtype),
            grid=grid,
            in_specs=[
                pl.BlockSpec((tm_eff, tk_eff), lambda i, k: (i, k)),   # x tile
                pl.BlockSpec((n_pad, tk_eff), lambda i, k: (0, k)),    # weight
                pl.BlockSpec((1, n_pad), lambda i, k: (0, 0)),         # bias
            ],
            out_specs=pl.BlockSpec((tm_eff, n_pad), lambda i, k: (i, 0)),
            scratch_shapes=[pltpu.VMEM((tm_eff, n_pad), jnp.float32)],
            compiler_params=pltpu.CompilerParams(
                dimension_semantics=("parallel", "arbitrary"),
            ),
        )(x2d, w2d, b2d)

    out = out2d[:m, :dim_out]                             # strip M / lane padding
    return out.reshape(b, num_patches, dim_out)           # 'b (p1 p2) c'


# ---------------------------------------------------------------------------
# Demo / correctness check
# ---------------------------------------------------------------------------
if __name__ == "__main__":
    # Small shapes consistent with the module.
    batch, in_ch, img, patch, dim_out = 2, 3, 16, 4, 32

    key = jax.random.PRNGKey(0)
    kx, kw, kb = jax.random.split(key, 3)

    x = jax.random.normal(kx, (batch, in_ch, img, img), dtype=jnp.float32)
    fan_in = in_ch * patch * patch
    weight = jax.random.normal(
        kw, (dim_out, in_ch, patch, patch), dtype=jnp.float32) * (fan_in ** -0.5)
    bias = jax.random.normal(kb, (dim_out,), dtype=jnp.float32) * 0.01

    fwd = jax.jit(lambda xx, ww, bb: cnn_patches_forward(xx, ww, bb))
    out = jax.block_until_ready(fwd(x, weight, bias))

    # Reference: exact conv + rearrange (same semantics as the PyTorch module).
    ref = jax.lax.conv_general_dilated(
        x, weight, window_strides=(patch, patch), padding="VALID",
        dimension_numbers=("NCHW", "OIHW", "NCHW"))
    ref = ref + bias[None, :, None, None]
    n_patches = (img // patch) * (img // patch)
    ref = ref.reshape(batch, dim_out, n_patches).transpose(0, 2, 1)

    assert out.shape == (batch, n_patches, dim_out), out.shape
    assert jnp.allclose(out, ref, atol=1e-4, rtol=1e-4)

    print("KERNEL_OK")
</pallas_src>

<mosaic_0001>
module attributes {stable_mosaic.version = 11 : i64} {
  func.func @_patch_embed_kernel_single_k(%arg0: i32, %arg1: memref<32x48xf32, #tpu.memory_space<vmem>>, %arg2: memref<128x48xf32, #tpu.memory_space<vmem>>, %arg3: memref<1x128xf32, #tpu.memory_space<vmem>>, %arg4: memref<32x128xf32, #tpu.memory_space<vmem>>) attributes {dimension_semantics = [#tpu.dimension_semantics<parallel>], iteration_bounds = array<i64: 1>, scalar_prefetch = 0 : i64, scratch_operands = 0 : i64, tpu.core_type = #tpu.core_type<tc>, window_params = [{transform_indices = @transform_0, window_bounds = array<i64: 32, 48>}, {pipeline_mode = #tpu.pipeline_mode<synchronous>, transform_indices = @transform_1, window_bounds = array<i64: 128, 48>}, {pipeline_mode = #tpu.pipeline_mode<synchronous>, transform_indices = @transform_2, window_bounds = array<i64: 1, 128>}, {transform_indices = @transform_3, window_bounds = array<i64: 32, 128>}]} {
    %c0 = arith.constant 0 : index
    %c0_0 = arith.constant 0 : index
    %0 = vector.load %arg1[%c0, %c0_0] : memref<32x48xf32, #tpu.memory_space<vmem>>, vector<32x48xf32>
    %c0_1 = arith.constant 0 : index
    %c0_2 = arith.constant 0 : index
    %1 = vector.load %arg2[%c0_1, %c0_2] : memref<128x48xf32, #tpu.memory_space<vmem>>, vector<128x48xf32>
    %cst = arith.constant dense<0.000000e+00> : vector<32x128xf32>
    %2 = tpu.matmul %0, %1, %cst {dimension_numbers = #tpu.dot_dimension_numbers<[1], [1], [0], [0], [0, 0, 1, 0], [], []>} : vector<32x48xf32>, vector<128x48xf32>, vector<32x128xf32> -> vector<32x128xf32>
    %c0_3 = arith.constant 0 : index
    %c0_4 = arith.constant 0 : index
    %3 = vector.load %arg3[%c0_3, %c0_4] : memref<1x128xf32, #tpu.memory_space<vmem>>, vector<1x128xf32>
    %4 = vector.broadcast %3 : vector<1x128xf32> to vector<32x128xf32>
    %5 = arith.addf %2, %4 : vector<32x128xf32>
    %c0_5 = arith.constant 0 : index
    %c0_6 = arith.constant 0 : index
    %6 = vector.load %arg4[%c0_5, %c0_6] : memref<32x128xf32, #tpu.memory_space<vmem>>, vector<32x128xf32>
    tpu.vector_store %arg4[%c0_5, %c0_6], %5 {strides = array<i32>} : memref<32x128xf32, #tpu.memory_space<vmem>>, vector<32x128xf32>,
    return
  }
  func.func @transform_0(%arg0: i32) -> (i32, i32) {
    %c0_i32 = arith.constant 0 : i32
    %c0_i32_0 = arith.constant 0 : i32
    return %arg0, %c0_i32 : i32, i32
  }
  func.func @transform_1(%arg0: i32) -> (i32, i32) {
    %c0_i32 = arith.constant 0 : i32
    %c0_i32_0 = arith.constant 0 : i32
    %c0_i32_1 = arith.constant 0 : i32
    return %c0_i32, %c0_i32_0 : i32, i32
  }
  func.func @transform_2(%arg0: i32) -> (i32, i32) {
    %c0_i32 = arith.constant 0 : i32
    %c0_i32_0 = arith.constant 0 : i32
    %c0_i32_1 = arith.constant 0 : i32
    return %c0_i32, %c0_i32_0 : i32, i32
  }
  func.func @transform_3(%arg0: i32) -> (i32, i32) {
    %c0_i32 = arith.constant 0 : i32
    %c0_i32_0 = arith.constant 0 : i32
    return %arg0, %c0_i32 : i32, i32
  }
}

</mosaic_0001>

<llo_original>
// kernel: _lambda_.1
$region0: #{_lambda_.1}
  #allocation0 [shape = 'u32[]', space=smem, size = 0x4, offset = 0x4, fixed_abs, tag = 'smem constant byte address 0x4 - core index']
  #allocation1 [shape = 'u32[72,128]{1,0:T(1,128)}', space=vmem, size = 0x9000, scoped, tag = 'internal scratch']
  %s0 = inlined_call_operand.vmem [shape: f32[32,48], index: 0, kind: input, shape index: {}]
  %s1 = inlined_call_operand.vmem [shape: f32[128,48], index: 1, kind: input, shape index: {}]
  %s2 = inlined_call_operand.vmem [shape: f32[1,128], index: 2, kind: input, shape index: {}]
  %s3 = inlined_call_operand.hbm [shape: f32[32,128], index: 3, kind: output, shape index: {}]
  %s4 = sld [smem:[#allocation0]]
  $region22: #{_lambda_.1} parent=0
    _
  %s6 = ssub.s32 1, %s4
  %s7 = scalar_select 0, %s6, %s4
  $region1: #{_lambda_.1} parent=0
    #allocation2 [shape = 'u8[16384]{0}', space=vmem, size = 0x4000, scoped, tag = 'output window, operand 0, single buffered']
    #allocation3 [shape = 's32[1]{0}', space=sflag, size = 0x4, scoped, tag = 'scoped memory for _lambda_.1']
    %8 = vsyncpa [#allocation3], 0
    // Predicated region
    $region2: #{_lambda_.1} parent=1 // pred_check
      _
    $region3: #{_lambda_.1} parent=1 // pred_check_branch
      %10 = sbr.rel (0) target = $region5
    $region4: #{_lambda_.1} parent=1 // pred_region
      _
    $region5: #{_lambda_.1} parent=1 // pred_fallthru
      _
    // Predicated region
    $region6: #{_lambda_.1} parent=1 // pred_check
      _
    $region7: #{_lambda_.1} parent=1 // pred_check_branch
      %12 = sbr.rel (0) target = $region9
    $region8: #{_lambda_.1} parent=1 // pred_region
      _
    $region9: #{_lambda_.1} parent=1 // pred_fallthru
      _
    // Predicated region
    $region10: #{_lambda_.1} parent=1 // pred_check
      _
    $region11: #{_lambda_.1} parent=1 // pred_check_branch
      %14 = sbr.rel (0) target = $region13
    $region12: #{_lambda_.1} parent=1 // pred_region
      _
    $region13: #{_lambda_.1} parent=1 // pred_fallthru
      _
    %v15 = vld [vmem:[%s0] sm:$0xff]
    %v16 = vld [vmem:[%s0 + $0x8] sm:$0xff]
    %v17 = vld [vmem:[%s0 + $0x10] sm:$0xff]
    %v18 = vld [vmem:[%s0 + $0x18] sm:$0xff]
    %v19 = vld [vmem:[%s1] sm:$0xff]
    %v20 = vld [vmem:[%s1 + $0x8] sm:$0xff]
    %v21 = vld [vmem:[%s1 + $0x10] sm:$0xff]
    %v22 = vld [vmem:[%s1 + $0x18] sm:$0xff]
    %v23 = vld [vmem:[%s1 + $0x20] sm:$0xff]
    %v24 = vld [vmem:[%s1 + $0x28] sm:$0xff]
    %v25 = vld [vmem:[%s1 + $0x30] sm:$0xff]
    %v26 = vld [vmem:[%s1 + $0x38] sm:$0xff]
    %v27 = vld [vmem:[%s1 + $0x40] sm:$0xff]
    %v28 = vld [vmem:[%s1 + $0x48] sm:$0xff]
    %v29 = vld [vmem:[%s1 + $0x50] sm:$0xff]
    %v30 = vld [vmem:[%s1 + $0x58] sm:$0xff]
    %v31 = vld [vmem:[%s1 + $0x60] sm:$0xff]
    %v32 = vld [vmem:[%s1 + $0x68] sm:$0xff]
    %v33 = vld [vmem:[%s1 + $0x70] sm:$0xff]
    %v34 = vld [vmem:[%s1 + $0x78] sm:$0xff]
    %v35 = vld [vmem:[%s2] sm:$0x1]
    %v37 = vperm.slane %v35, 0
    %vm39 = vcmask 392192
    %v41 = vsel %vm39, %v15, 0
    %v44 = vsel %vm39, %v16, 0
    %v47 = vsel %vm39, %v17, 0
    %v50 = vsel %vm39, %v18, 0
    %v53 = vsel %vm39, %v19, 0
    %v56 = vsel %vm39, %v20, 0
    %v59 = vsel %vm39, %v21, 0
    %v62 = vsel %vm39, %v22, 0
    %v65 = vsel %vm39, %v23, 0
    %v68 = vsel %vm39, %v24, 0
    %v71 = vsel %vm39, %v25, 0
    %v74 = vsel %vm39, %v26, 0
    %v77 = vsel %vm39, %v27, 0
    %v80 = vsel %vm39, %v28, 0
    %v83 = vsel %vm39, %v29, 0
    %v86 = vsel %vm39, %v30, 0
    %v89 = vsel %vm39, %v31, 0
    %v92 = vsel %vm39, %v32, 0
    %v95 = vsel %vm39, %v33, 0
    %v98 = vsel %vm39, %v34, 0
    %100 = vmatpush.xpose.msra.mxu0 %v98
    %101 = vmatpush.xpose.msra.mxu0 %v95
    %102 = vmatpush.xpose.msra.mxu0 %v92
    %103 = vmatpush.xpose.msra.mxu0 %v89
    %104 = vmatpush.xpose.msra.mxu0 %v86
    %105 = vmatpush.xpose.msra.mxu0 %v83
    %106 = vmatpush.xpose.msra.mxu0 %v80
    %107 = vmatpush.xpose.msra.mxu0 %v77
    %108 = vmatpush.xpose.msra.mxu0 %v74
    %109 = vmatpush.xpose.msra.mxu0 %v71
    %110 = vmatpush.xpose.msra.mxu0 %v68
    %111 = vmatpush.xpose.msra.mxu0 %v65
    %112 = vmatpush.xpose.msra.mxu0 %v62
    %113 = vmatpush.xpose.msra.mxu0 %v59
    %114 = vmatpush.xpose.msra.mxu0 %v56
    %115 = vmatpush.xpose.msra.mxu0 %v53
    %116 = vmatmul.f32.gmra.mxu0 %v41
    %v117 = vpop.f32.mrf.mxu0
    %v118 = vadd.f32 %v37, %v117
    %119 = vmatmul.f32.gmra.mxu0 %v44
    %v120 = vpop.f32.mrf.mxu0
    %v121 = vadd.f32 %v37, %v120
    %122 = vmatmul.f32.gmra.mxu0 %v47
    %v123 = vpop.f32.mrf.mxu0
    %v124 = vadd.f32 %v37, %v123
    %125 = vmatmul.f32.gmra.mxu0 %v50
    %v126 = vpop.f32.mrf.mxu0
    %v127 = vadd.f32 %v37, %v126
    %128 = vdwg.mxu0
    %129 = vst [vmem:[#allocation2] sm:$0xff] %v118
    %130 = vst [vmem:[#allocation2 + $0x8] sm:$0xff] %v121
    %131 = vst [vmem:[#allocation2 + $0x10] sm:$0xff] %v124
    %132 = vst [vmem:[#allocation2 + $0x18] sm:$0xff] %v127
    // Predicated region
    $region14: #{_lambda_.1} parent=1 // pred_check
      _
    $region15: #{_lambda_.1} parent=1 // pred_check_branch
      %134 = sbr.rel (0) target = $region17
    $region16: #{_lambda_.1} parent=1 // pred_region
      %136 = vsyncadd [#allocation3], 0
      %s137 = sshll.u32 [#allocation2], 4
      %s138 = int_to_ptr.vmem [resolvable:$true] %s137
      %s139 = sshll.u32 %s3, 4
      %s140 = int_to_ptr.hbm [resolvable:$true] %s139
      %145 = dma.vmem_to_hbm [thread:$0]  %s138, 512, %s140, [#allocation3], 128, 128, 8
    $region17: #{_lambda_.1} parent=1 // pred_fallthru
      _
    // Predicated region
    $region18: #{_lambda_.1} parent=1 // pred_check
      _
    $region19: #{_lambda_.1} parent=1 // pred_check_branch
      %147 = sbr.rel (0) target = $region21
    $region20: #{_lambda_.1} parent=1 // pred_region
      %149 = dma.done [#allocation3], 512
    $region21: #{_lambda_.1} parent=1 // pred_fallthru
      _
    %150 = vsyncpa [#allocation3], 1

</llo_original>
